<compile_context>
chip_gen: v7x
topology: tpu7x:2x2x1
jax: 0.10.0
libtpu: 0.0.40
codegen_flags: <defaults>
</compile_context>

<pallas_src>
import jax
import jax.numpy as jnp
from jax import lax
from jax.experimental import pallas as pl
from jax.experimental.pallas import tpu as pltpu

_EPS = 1e-6
_LANES = 128
_STRIP_ROWS = 512  # rows per in-kernel strip (bounds f32 temporaries)
# Candidate block heights, largest first (all powers of two, multiples of 8).
_BLOCK_ROW_CANDIDATES = (4096, 2048, 1024, 512, 256, 128, 64, 32, 16, 8)


def _charbonnier_sum_kernel(x_ref, y_ref, o_ref, acc_ref):
    # Grid = (P parallel slices, inner reduction steps).
    j = pl.program_id(1)

    @pl.when(j == 0)
    def _init():
        acc_ref[...] = jnp.zeros_like(acc_ref)

    block_rows = x_ref.shape[1]
    strip_rows = min(_STRIP_ROWS, block_rows)
    n_strips = block_rows // strip_rows

    def strip_body(s, carry):
        r0 = pl.multiple_of(s * strip_rows, strip_rows)
        x = x_ref[0, pl.ds(r0, strip_rows), :].astype(jnp.float32)
        y = y_ref[0, pl.ds(r0, strip_rows), :].astype(jnp.float32)
        diff = x - y
        err = jnp.sqrt(diff * diff + jnp.float32(_EPS))
        # Lane-parallel partial reduction: fold this strip's sublane groups into
        # the resident (8, 128) accumulator (pure VPU adds; no XLU in the loop).
        acc_ref[...] += jnp.sum(err.reshape(strip_rows // 8, 8, _LANES), axis=0)
        return carry

    lax.fori_loop(0, n_strips, strip_body, 0, unroll=True)

    # Single cross-lane/sublane reduce only on the final inner step.
    @pl.when(j == pl.num_programs(1) - 1)
    def _flush():
        o_ref[...] = jnp.sum(acc_ref[...]).reshape(1, 1, 1)


def l1_charbonnier_loss(x, y):
    assert x.shape == y.shape
    total = x.size

    xf = jnp.ravel(x)
    yf = jnp.ravel(y)

    rows_avail = total // _LANES  # complete 128-lane rows available

    # Largest power-of-two block height that yields at least one full block.
    block_rows = 0
    for cand in _BLOCK_ROW_CANDIDATES:
        if rows_avail >= cand:
            block_rows = cand
            break

    total_sum = jnp.float32(0.0)
    bulk_elems = 0

    if block_rows:
        nblocks = rows_avail // block_rows
        # Megacore split: 2 parallel slices when they divide the work evenly
        # (uses both TensorCores on v7x; harmless sequential outer loop on
        # v5e/v6e).
        num_slices = 2 if (nblocks % 2 == 0 and nblocks >= 2) else 1
        inner = nblocks // num_slices
        rows_bulk = nblocks * block_rows
        bulk_elems = rows_bulk * _LANES

        x3 = xf[:bulk_elems].reshape(num_slices, inner * block_rows, _LANES)
        y3 = yf[:bulk_elems].reshape(num_slices, inner * block_rows, _LANES)

        partials = pl.pallas_call(
            _charbonnier_sum_kernel,
            out_shape=jax.ShapeDtypeStruct((num_slices, 1, 1), jnp.float32),
            grid_spec=pltpu.PrefetchScalarGridSpec(
                num_scalar_prefetch=0,
                grid=(num_slices, inner),
                in_specs=[
                    pl.BlockSpec((1, block_rows, _LANES), lambda p, j: (p, j, 0)),
                    pl.BlockSpec((1, block_rows, _LANES), lambda p, j: (p, j, 0)),
                ],
                out_specs=pl.BlockSpec((1, 1, 1), lambda p, j: (p, 0, 0)),
                scratch_shapes=[pltpu.VMEM((8, _LANES), jnp.float32)],
            ),
            compiler_params=pltpu.CompilerParams(
                dimension_semantics=("parallel", "arbitrary"),
                vmem_limit_bytes=32 * 1024 * 1024,
            ),
        )(x3, y3)
        total_sum = jnp.sum(partials)

    # Sub-block tail (< one tile): plain jnp, reads the remainder exactly once.
    if bulk_elems < total:
        xt = xf[bulk_elems:].astype(jnp.float32)
        yt = yf[bulk_elems:].astype(jnp.float32)
        dt = xt - yt
        total_sum = total_sum + jnp.sum(jnp.sqrt(dt * dt + jnp.float32(_EPS)))

    return total_sum / jnp.float32(total)


if __name__ == "__main__":
    key = jax.random.PRNGKey(0)
    kx, ky = jax.random.split(key)

    # NCHW inputs, matching the PyTorch convention.
    X = jax.random.normal(kx, (2, 4, 16, 16), dtype=jnp.float32)
    Y = jax.random.normal(ky, (2, 4, 16, 16), dtype=jnp.float32)

    loss = l1_charbonnier_loss(X, Y)
    jax.block_until_ready(loss)
    ref = jnp.mean(jnp.sqrt((X - Y) ** 2 + _EPS))
    assert jnp.allclose(loss, ref, rtol=1e-5, atol=1e-6), (loss, ref)

    # Ragged size that exercises both the bulk kernel and the jnp tail path.
    kx2, ky2 = jax.random.split(ky)
    X2 = jax.random.normal(kx2, (2, 3, 37, 41), dtype=jnp.float32)
    Y2 = jax.random.normal(ky2, (2, 3, 37, 41), dtype=jnp.float32)
    loss2 = l1_charbonnier_loss(X2, Y2)
    jax.block_until_ready(loss2)
    ref2 = jnp.mean(jnp.sqrt((X2 - Y2) ** 2 + _EPS))
    assert jnp.allclose(loss2, ref2, rtol=1e-5, atol=1e-6), (loss2, ref2)

    # Tiny size (< one tile): entire reduction goes through the tail path.
    kx3, ky3 = jax.random.split(ky2)
    X3 = jax.random.normal(kx3, (1, 3, 13, 7), dtype=jnp.float32)
    Y3 = jax.random.normal(ky3, (1, 3, 13, 7), dtype=jnp.float32)
    loss3 = l1_charbonnier_loss(X3, Y3)
    jax.block_until_ready(loss3)
    ref3 = jnp.mean(jnp.sqrt((X3 - Y3) ** 2 + _EPS))
    assert jnp.allclose(loss3, ref3, rtol=1e-5, atol=1e-6), (loss3, ref3)

    print("KERNEL_OK")
</pallas_src>

<mosaic_0001>
module attributes {stable_mosaic.version = 11 : i64} {
  func.func @_charbonnier_sum_kernel(%arg0: i32, %arg1: i32, %arg2: memref<1x16x128xf32, #tpu.memory_space<vmem>>, %arg3: memref<1x16x128xf32, #tpu.memory_space<vmem>>, %arg4: memref<1x1x1xf32, #tpu.memory_space<vmem>>, %arg5: memref<8x128xf32, #tpu.memory_space<vmem>>) attributes {dimension_semantics = [#tpu.dimension_semantics<parallel>, #tpu.dimension_semantics<arbitrary>], iteration_bounds = array<i64: 1, 1>, scalar_prefetch = 0 : i64, scratch_operands = 1 : i64, tpu.core_type = #tpu.core_type<tc>, window_params = [{transform_indices = @transform_0, window_bounds = array<i64: 1, 16, 128>}, {transform_indices = @transform_1, window_bounds = array<i64: 1, 16, 128>}, {transform_indices = @transform_2, window_bounds = array<i64: 1, 1, 1>}]} {
    %c0_i32 = arith.constant 0 : i32
    %0 = arith.cmpi eq, %arg1, %c0_i32 : i32
    %1 = arith.extui %0 : i1 to i32
    %c0_i32_0 = arith.constant 0 : i32
    %2 = arith.cmpi ne, %1, %c0_i32_0 : i32
    scf.if %2 {
      %cst_12 = arith.constant 0.000000e+00 : f32
      %24 = vector.broadcast %cst_12 : f32 to vector<8x128xf32>
      %c0_13 = arith.constant 0 : index
      %c0_14 = arith.constant 0 : index
      %25 = vector.load %arg5[%c0_13, %c0_14] : memref<8x128xf32, #tpu.memory_space<vmem>>, vector<8x128xf32>
      tpu.vector_store %arg5[%c0_13, %c0_14], %24 {strides = array<i32>} : memref<8x128xf32, #tpu.memory_space<vmem>>, vector<8x128xf32>,
    } else {
    }
    %c0_i32_1 = arith.constant 0 : i32
    %c16_i32 = arith.constant 16 : i32
    %3 = arith.muli %c0_i32_1, %c16_i32 : i32
    %4 = tpu.assume_multiple %3, 16 : i32
    %c0 = arith.constant 0 : index
    %5 = arith.index_cast %4 : i32 to index
    %c0_2 = arith.constant 0 : index
    %6 = vector.load %arg2[%c0, %5, %c0_2] : memref<1x16x128xf32, #tpu.memory_space<vmem>>, vector<1x16x128xf32>
    %7 = vector.shape_cast %6 : vector<1x16x128xf32> to vector<16x128xf32>
    %c0_3 = arith.constant 0 : index
    %8 = arith.index_cast %4 : i32 to index
    %c0_4 = arith.constant 0 : index
    %9 = vector.load %arg3[%c0_3, %8, %c0_4] : memref<1x16x128xf32, #tpu.memory_space<vmem>>, vector<1x16x128xf32>
    %10 = vector.shape_cast %9 : vector<1x16x128xf32> to vector<16x128xf32>
    %11 = arith.subf %7, %10 : vector<16x128xf32>
    %12 = arith.mulf %11, %11 : vector<16x128xf32>
    %cst = arith.constant 9.99999997E-7 : f32
    %13 = vector.broadcast %cst : f32 to vector<16x128xf32>
    %14 = arith.addf %12, %13 : vector<16x128xf32>
    %15 = math.sqrt %14 : vector<16x128xf32>
    %c0_5 = arith.constant 0 : index
    %c0_6 = arith.constant 0 : index
    %16 = vector.load %arg5[%c0_5, %c0_6] : memref<8x128xf32, #tpu.memory_space<vmem>>, vector<8x128xf32>
    %17 = vector.shape_cast %15 : vector<16x128xf32> to vector<2x8x128xf32>
    %cst_7 = arith.constant dense<0.000000e+00> : vector<8x128xf32>
    %18 = vector.multi_reduction <add>, %17, %cst_7 [0] : vector<2x8x128xf32> to vector<8x128xf32>
    %19 = arith.addf %16, %18 : vector<8x128xf32>
    %c0_8 = arith.constant 0 : index
    %c0_9 = arith.constant 0 : index
    %20 = vector.load %arg5[%c0_8, %c0_9] : memref<8x128xf32, #tpu.memory_space<vmem>>, vector<8x128xf32>
    tpu.vector_store %arg5[%c0_8, %c0_9], %19 {strides = array<i32>} : memref<8x128xf32, #tpu.memory_space<vmem>>, vector<8x128xf32>,
    %c1_i32 = arith.constant 1 : i32
    %c0_i32_10 = arith.constant 0 : i32
    %21 = arith.cmpi eq, %arg1, %c0_i32_10 : i32
    %22 = arith.extui %21 : i1 to i32
    %c0_i32_11 = arith.constant 0 : i32
    %23 = arith.cmpi ne, %22, %c0_i32_11 : i32
    scf.if %23 {
      %c0_12 = arith.constant 0 : index
      %c0_13 = arith.constant 0 : index
      %24 = vector.load %arg5[%c0_12, %c0_13] : memref<8x128xf32, #tpu.memory_space<vmem>>, vector<8x128xf32>
      %25 = vector.shape_cast %24 : vector<8x128xf32> to vector<1x8x128xf32>
      %cst_14 = arith.constant dense<0.000000e+00> : vector<1xf32>
      %26 = vector.multi_reduction <add>, %25, %cst_14 [1, 2] : vector<1x8x128xf32> to vector<1xf32>
      %27 = vector.shape_cast %26 : vector<1xf32> to vector<1x1x1xf32>
      %28 = vector.extract %27[0, 0, 0] : f32 from vector<1x1x1xf32>
      %29 = vector.broadcast %28 : f32 to vector<1x1x1xf32>
      %c0_15 = arith.constant 0 : index
      %c0_16 = arith.constant 0 : index
      %c0_17 = arith.constant 0 : index
      %30 = vector.load %arg4[%c0_15, %c0_16, %c0_17] : memref<1x1x1xf32, #tpu.memory_space<vmem>>, vector<1x1x1xf32>
      tpu.vector_store %arg4[%c0_15, %c0_16, %c0_17], %29 {strides = array<i32>} : memref<1x1x1xf32, #tpu.memory_space<vmem>>, vector<1x1x1xf32>,
    } else {
    }
    return
  }
  func.func @transform_0(%arg0: i32, %arg1: i32) -> (i32, i32, i32) {
    %c0_i32 = arith.constant 0 : i32
    %c0_i32_0 = arith.constant 0 : i32
    return %arg0, %arg1, %c0_i32 : i32, i32, i32
  }
  func.func @transform_1(%arg0: i32, %arg1: i32) -> (i32, i32, i32) {
    %c0_i32 = arith.constant 0 : i32
    %c0_i32_0 = arith.constant 0 : i32
    return %arg0, %arg1, %c0_i32 : i32, i32, i32
  }
  func.func @transform_2(%arg0: i32, %arg1: i32) -> (i32, i32, i32) {
    %c0_i32 = arith.constant 0 : i32
    %c0_i32_0 = arith.constant 0 : i32
    %c0_i32_1 = arith.constant 0 : i32
    return %arg0, %c0_i32, %c0_i32_0 : i32, i32, i32
  }
}

</mosaic_0001>

<llo_original>
// kernel: tpu_custom_call.1
$region0: #{tpu_custom_call.1}
  #allocation0 [shape = 'u32[]', space=smem, size = 0x4, offset = 0x4, fixed_abs, tag = 'smem constant byte address 0x4 - core index']
  #allocation1 [shape = 'u32[144,128]{1,0:T(1,128)}', space=vmem, size = 0x12000, scoped, tag = 'internal scratch']
  #allocation2 [shape = 'f32[8,128]{1,0:T(8,128)}', space=vmem, size = 0x1000, scoped, tag = 'scratch operand']
  %s0 = inlined_call_operand.hbm [shape: f32[1,16,128], index: 0, kind: input, shape index: {}]
  %s1 = inlined_call_operand.hbm [shape: f32[1,16,128], index: 1, kind: input, shape index: {}]
  %s2 = inlined_call_operand.hbm [shape: f32[1,1,1], index: 2, kind: output, shape index: {}]
  %s3 = sld [smem:[#allocation0]]
  $region34: #{tpu_custom_call.1} parent=0
    _
  %s5 = ssub.s32 1, %s3
  %s6 = scalar_select 0, %s5, %s3
  $region1: #{tpu_custom_call.1} parent=0
    #allocation3 [shape = 'u8[8192]{0}', space=vmem, size = 0x2000, scoped, tag = 'input window, operand 0, single buffered']
    #allocation4 [shape = 's32[1]{0}', space=sflag, size = 0x4, scoped, tag = 'scoped memory for tpu_custom_call.1']
    #allocation5 [shape = 's32[1]{0}', space=sflag, size = 0x4, scoped, tag = 'scoped memory for tpu_custom_call.1']
    #allocation6 [shape = 'u8[8192]{0}', space=vmem, size = 0x2000, scoped, tag = 'input window, operand 1, single buffered']
    #allocation7 [shape = 's32[1]{0}', space=sflag, size = 0x4, scoped, tag = 'scoped memory for tpu_custom_call.1']
    #allocation8 [shape = 'u8[512]{0}', space=vmem, size = 0x400, scoped, tag = 'output window, operand 0, single buffered']
    %7 = vsyncpa [#allocation4], 0
    %8 = vsyncpa [#allocation7], 0
    %9 = vsyncpa [#allocation5], 0
    // Predicated region
    $region2: #{tpu_custom_call.1} parent=1 // pred_check
      _
    $region3: #{tpu_custom_call.1} parent=1 // pred_check_branch
      %11 = sbr.rel (0) target = $region5
    $region4: #{tpu_custom_call.1} parent=1 // pred_region
      %s13 = ssub.s32 256, 256
      %14 = vsyncadd [#allocation4], %s13
      %s15 = sshll.u32 [#allocation3], 4
      %s16 = int_to_ptr.vmem [resolvable:$true] %s15
      %21 = dma.hbm_to_vmem [thread:$0]  %s0, 256, %s16, [#allocation4], 128, 128, 8
    $region5: #{tpu_custom_call.1} parent=1 // pred_fallthru
      _
    // Predicated region
    $region6: #{tpu_custom_call.1} parent=1 // pred_check
      _
    $region7: #{tpu_custom_call.1} parent=1 // pred_check_branch
      %23 = sbr.rel (0) target = $region9
    $region8: #{tpu_custom_call.1} parent=1 // pred_region
      %s25 = ssub.s32 256, 256
      %26 = vsyncadd [#allocation7], %s25
      %s27 = sshll.u32 [#allocation6], 4
      %s28 = int_to_ptr.vmem [resolvable:$true] %s27
      %33 = dma.hbm_to_vmem [thread:$0]  %s1, 256, %s28, [#allocation7], 128, 128, 8
    $region9: #{tpu_custom_call.1} parent=1 // pred_fallthru
      _
    // Predicated region
    $region10: #{tpu_custom_call.1} parent=1 // pred_check
      _
    $region11: #{tpu_custom_call.1} parent=1 // pred_check_branch
      %35 = sbr.rel (0) target = $region13
    $region12: #{tpu_custom_call.1} parent=1 // pred_region
      %36 = dma.done [#allocation4], 256
    $region13: #{tpu_custom_call.1} parent=1 // pred_fallthru
      _
    // Predicated region
    $region14: #{tpu_custom_call.1} parent=1 // pred_check
      _
    $region15: #{tpu_custom_call.1} parent=1 // pred_check_branch
      %38 = sbr.rel (0) target = $region17
    $region16: #{tpu_custom_call.1} parent=1 // pred_region
      %39 = dma.done [#allocation7], 256
    $region17: #{tpu_custom_call.1} parent=1 // pred_fallthru
      _
    %p40 = scmp.eq.s32.totalorder 0, 0
    // Predicated region
    $region18: #{tpu_custom_call.1} parent=1 // pred_check
      %p41 = pneg %p40
    $region19: #{tpu_custom_call.1} parent=1 // pred_check_branch
      %43 = sbr.rel (%p41) target = $region21
    $region20: #{tpu_custom_call.1} parent=1 // pred_region
      %44 = vst [vmem:[#allocation2] sm:$0xff] 0.0
    $region21: #{tpu_custom_call.1} parent=1 // pred_fallthru
      _
    %v45 = vld [vmem:[#allocation3] sm:$0xff]
    %v46 = vld [vmem:[#allocation3 + $0x8] sm:$0xff]
    %v47 = vld [vmem:[#allocation6] sm:$0xff]
    %v48 = vld [vmem:[#allocation6 + $0x8] sm:$0xff]
    %v49 = vsub.f32 %v45, %v47
    %v50 = vsub.f32 %v46, %v48
    %v51 = vmul.f32 %v49, %v49
    %v52 = vmul.f32 %v50, %v50
    %v53 = vadd.f32 %v51, 1e-06
    %v54 = vadd.f32 %v52, 1e-06
    %v55 = vrsqrt.pop %v53
    %v56 = vmul.f32 %v53, %v55
    %vm57 = vcmp.eq.f32.partialorder %v53, inf
    %v58 = vsel %vm57, %v53, %v56
    %vm59 = vcmp.eq.f32.partialorder %v53, 0.0
    %v60 = vand.u32 %v53, 2147483648
    %v61 = vsel %vm59, %v60, %v58
    %v62 = vrsqrt.pop %v54
    %v63 = vmul.f32 %v54, %v62
    %vm64 = vcmp.eq.f32.partialorder %v54, inf
    %v65 = vsel %vm64, %v54, %v63
    %vm66 = vcmp.eq.f32.partialorder %v54, 0.0
    %v67 = vand.u32 %v54, 2147483648
    %v68 = vsel %vm66, %v67, %v65
    %v69 = vld [vmem:[#allocation2] sm:$0xff]
    %v70 = vadd.f32 %v61, %v68
    %v71 = vadd.f32 %v69, %v70
    %72 = vst [vmem:[#allocation2] sm:$0xff] %v71
    // Predicated region
    $region22: #{tpu_custom_call.1} parent=1 // pred_check
      %p73 = pneg %p40
    $region23: #{tpu_custom_call.1} parent=1 // pred_check_branch
      %75 = sbr.rel (%p73) target = $region25
    $region24: #{tpu_custom_call.1} parent=1 // pred_region
      %v76 = vld [vmem:[#allocation2] sm:$0xff]
      %77 = vadd.xlane.f32.xlu0 %v76
      %v78 = vpop.xlane.xlu0 %77
      %v79 = vrot.slane %v78, 4
      %v80 = vadd.f32 %v78, %v79
      %v81 = vrot.slane %v80, 2
      %v82 = vadd.f32 %v80, %v81
      %v83 = vrot.slane %v82, 1
      %v84 = vadd.f32 %v82, %v83
      %s85 = vtos %v84
      %v86 = vstv %s85
      %vm87 = vcmask 0
      %88 = vst.msk [vmem:[#allocation8] sm:$0x1] %vm87, %v86
    $region25: #{tpu_custom_call.1} parent=1 // pred_fallthru
      _
    // Predicated region
    $region26: #{tpu_custom_call.1} parent=1 // pred_check
      _
    $region27: #{tpu_custom_call.1} parent=1 // pred_check_branch
      %90 = sbr.rel (0) target = $region29
    $region28: #{tpu_custom_call.1} parent=1 // pred_region
      %s92 = ssub.s32 16, 16
      %93 = vsyncadd [#allocation5], %s92
      %s95 = sshll.u32 [#allocation8], 4
      %s96 = int_to_ptr.vmem [resolvable:$true] %s95
      %98 = dma.vmem_to_hbm [thread:$0]  %s96, 16, %s2, [#allocation5]
    $region29: #{tpu_custom_call.1} parent=1 // pred_fallthru
      _
    // Predicated region
    $region30: #{tpu_custom_call.1} parent=1 // pred_check
      _
    $region31: #{tpu_custom_call.1} parent=1 // pred_check_branch
      %100 = sbr.rel (0) target = $region33
    $region32: #{tpu_custom_call.1} parent=1 // pred_region
      %101 = dma.done [#allocation5], 16
    $region33: #{tpu_custom_call.1} parent=1 // pred_fallthru
      _
    %102 = vsyncpa [#allocation4], 1
    %103 = vsyncpa [#allocation7], 1
    %104 = vsyncpa [#allocation5], 1

</llo_original>
